<compile_context>
chip_gen: v7x
topology: tpu7x:2x2x1
jax: 0.10.0
libtpu: 0.0.40
codegen_flags: <defaults>
</compile_context>

<pallas_src>
import functools

import jax
import jax.numpy as jnp
from jax import lax
from jax.experimental import pallas as pl
from jax.experimental.pallas import tpu as pltpu

EPS = 1e-6          # matches the module's self.eps = 1e-06
_LANE = 128         # TPU lane width; channel tiles are multiples of this
_SUBLANE = 8


# --------------------------------------------------------------------------
# VMEM / tile policy
# --------------------------------------------------------------------------
def _vmem_policy():
    """Return (vmem_limit_bytes, tile_budget_bytes) for the current chip."""
    try:
        phys = int(pltpu.get_tpu_info().vmem_capacity_bytes)
    except Exception:
        phys = 64 * 1024 * 1024          # conservative fallback (v7x: 64 MiB/TC)
    # ~25% headroom below physical, capped at 96 MiB:
    #   v5e/v6e (128 MiB phys) -> 96 MiB limit; v7x (64 MiB phys) -> 48 MiB limit.
    limit = max(32 * 1024 * 1024, min((phys * 3) // 4, 96 * 1024 * 1024))
    budget = int(limit * 0.7)            # pipeline working-set target
    return limit, budget


def _pick_tile_c(n_rows, c_lane, itemsize, budget):
    """Largest lane-multiple channel tile whose working set fits the budget.

    Per tile column we hold roughly: double-buffered x and y tiles
    (2 buffers * 2 arrays * itemsize) plus ~3 live f32 temporaries.
    Returns None when even an (N, 128) column block does not fit (-> two-pass).
    """
    bytes_per_col = n_rows * (4 * itemsize + 3 * 4)
    tile = (budget // max(bytes_per_col, 1)) // _LANE * _LANE
    if tile < _LANE:
        return None
    tile = min(tile, c_lane)
    # Guarantee >= 2 channel tiles when possible so the "parallel" channel axis
    # can be sharded across both TensorCores on v7x.
    if tile >= c_lane and c_lane >= 2 * _LANE:
        tile = pl.cdiv(c_lane // _LANE, 2) * _LANE
    return int(tile)


def _pick_tiles_two_pass(n_rows, c_lane, itemsize, budget):
    """(tile_n, tile_c) for the large-N two-pass path."""
    tile_c = int(min(c_lane, 8 * _LANE))                     # up to 1024 lanes
    bytes_per_row = tile_c * (4 * itemsize + 3 * 4)
    tile_n = (budget // max(bytes_per_row, 1)) // _SUBLANE * _SUBLANE
    tile_n = int(max(_SUBLANE, min(tile_n, pl.cdiv(n_rows, _SUBLANE) * _SUBLANE)))
    return tile_n, tile_c


# --------------------------------------------------------------------------
# Kernels
# --------------------------------------------------------------------------
def _bn_single_pass_kernel(x_ref, mu_ref, sigma_ref, y_ref, mean_ref, var_ref):
    # x_ref: (N, TILE_C); mu/sigma/mean/var refs: (1, TILE_C) f32.
    x = x_ref[...].astype(jnp.float32)
    n = x.shape[0]

    mean = jnp.mean(x, axis=0, keepdims=True)                      # (1, TILE_C)
    centered = x - mean
    # torch.var(dim=0) default is UNBIASED -> divide by (N - 1)
    var = jnp.sum(centered * centered, axis=0, keepdims=True) * (1.0 / (n - 1))

    scale = sigma_ref[...] * lax.rsqrt(var + EPS)                  # (1, TILE_C)
    bias = mu_ref[...] - mean * scale                              # (1, TILE_C)

    y_ref[...] = (x * scale + bias).astype(y_ref.dtype)
    mean_ref[...] = mean
    var_ref[...] = var


def _bn_stats_kernel(x_ref, mean_ref, var_ref, *, n_total, tile_n):
    # Grid: (c, n) with n ("arbitrary") last; mean_ref/var_ref are resident
    # (1, TILE_C) accumulators holding running sum / sum-of-squares.
    n_blk = pl.program_id(1)

    @pl.when(n_blk == 0)
    def _():
        mean_ref[...] = jnp.zeros_like(mean_ref)
        var_ref[...] = jnp.zeros_like(var_ref)

    x = x_ref[...].astype(jnp.float32)
    # Mask rows past N (ragged last batch block): garbage rows must not feed
    # the reduction.  jnp.where (a select) is NaN-safe, unlike multiply-by-mask.
    row = lax.broadcasted_iota(jnp.int32, x.shape, 0) + n_blk * tile_n
    x = jnp.where(row < n_total, x, 0.0)

    mean_ref[...] += jnp.sum(x, axis=0, keepdims=True)        # running sum
    var_ref[...] += jnp.sum(x * x, axis=0, keepdims=True)     # running sum-sq

    @pl.when(n_blk == pl.num_programs(1) - 1)
    def _():
        s = mean_ref[...]
        ss = var_ref[...]
        mean = s * (1.0 / n_total)
        # TODO(synk): sum-of-squares form can lose precision for huge N with
        # large offsets; switch to a chunk-centered/Welford accumulation if
        # that regime matters.
        var = (ss - n_total * mean * mean) * (1.0 / (n_total - 1))
        mean_ref[...] = mean
        var_ref[...] = var


def _bn_normalize_kernel(x_ref, mean_ref, var_ref, mu_ref, sigma_ref, y_ref):
    scale = sigma_ref[...] * lax.rsqrt(var_ref[...] + EPS)
    bias = mu_ref[...] - mean_ref[...] * scale
    y_ref[...] = (x_ref[...].astype(jnp.float32) * scale + bias).astype(y_ref.dtype)


# --------------------------------------------------------------------------
# Wrapper
# --------------------------------------------------------------------------
def batchnorm_forward(x, theta_mu, theta_sigma, *, tile_c=None, tile_n=None,
                      two_pass=None):
    """Training-mode BatchNorm forward. Returns (y, batch_mean, batch_var)."""
    N, C = x.shape
    if N < 2:
        # torch.var(dim=0) (unbiased) is undefined / NaN for N == 1.
        raise ValueError("Training-mode BatchNorm requires N >= 2.")

    limit, budget = _vmem_policy()
    c_lane = pl.cdiv(C, _LANE) * _LANE

    mu2d = theta_mu.reshape(1, C).astype(jnp.float32)
    sigma2d = theta_sigma.reshape(1, C).astype(jnp.float32)

    if tile_c is not None:
        auto_tile = int(max(_LANE, (int(tile_c) // _LANE) * _LANE))
    else:
        auto_tile = _pick_tile_c(N, c_lane, x.dtype.itemsize, budget)
    if two_pass is None:
        two_pass = auto_tile is None

    if not two_pass:
        tc = auto_tile if auto_tile is not None else _LANE
        grid_c = pl.cdiv(C, tc)
        y, mean, var = pl.pallas_call(
            _bn_single_pass_kernel,
            out_shape=(
                jax.ShapeDtypeStruct((N, C), x.dtype),
                jax.ShapeDtypeStruct((1, C), jnp.float32),
                jax.ShapeDtypeStruct((1, C), jnp.float32),
            ),
            grid=(grid_c,),
            in_specs=[
                pl.BlockSpec((N, tc), lambda c: (0, c)),
                pl.BlockSpec((1, tc), lambda c: (0, c)),
                pl.BlockSpec((1, tc), lambda c: (0, c)),
            ],
            out_specs=(
                pl.BlockSpec((N, tc), lambda c: (0, c)),
                pl.BlockSpec((1, tc), lambda c: (0, c)),
                pl.BlockSpec((1, tc), lambda c: (0, c)),
            ),
            compiler_params=pltpu.CompilerParams(
                dimension_semantics=("parallel",),     # channel tiles independent
                vmem_limit_bytes=limit,
            ),
        )(x, mu2d, sigma2d)
        return y, mean[0], var[0]

    # ---------------- large-N two-pass path ----------------
    tn, tc = _pick_tiles_two_pass(N, c_lane, x.dtype.itemsize, budget)
    if tile_c is not None:
        tc = int(max(_LANE, min((int(tile_c) // _LANE) * _LANE, c_lane)))
    if tile_n is not None:
        tn = int(max(_SUBLANE, (int(tile_n) // _SUBLANE) * _SUBLANE))
    grid_c = pl.cdiv(C, tc)
    grid_n = pl.cdiv(N, tn)

    stats_kernel = functools.partial(_bn_stats_kernel, n_total=N, tile_n=tn)
    mean, var = pl.pallas_call(
        stats_kernel,
        out_shape=(
            jax.ShapeDtypeStruct((1, C), jnp.float32),
            jax.ShapeDtypeStruct((1, C), jnp.float32),
        ),
        grid=(grid_c, grid_n),                     # reduction (N) axis last
        in_specs=[pl.BlockSpec((tn, tc), lambda c, n: (n, c))],
        out_specs=(
            pl.BlockSpec((1, tc), lambda c, n: (0, c)),
            pl.BlockSpec((1, tc), lambda c, n: (0, c)),
        ),
        compiler_params=pltpu.CompilerParams(
            dimension_semantics=("parallel", "arbitrary"),
            vmem_limit_bytes=limit,
        ),
    )(x)

    y = pl.pallas_call(
        _bn_normalize_kernel,
        out_shape=jax.ShapeDtypeStruct((N, C), x.dtype),
        grid=(grid_c, grid_n),
        in_specs=[
            pl.BlockSpec((tn, tc), lambda c, n: (n, c)),
            pl.BlockSpec((1, tc), lambda c, n: (0, c)),
            pl.BlockSpec((1, tc), lambda c, n: (0, c)),
            pl.BlockSpec((1, tc), lambda c, n: (0, c)),
            pl.BlockSpec((1, tc), lambda c, n: (0, c)),
        ],
        out_specs=pl.BlockSpec((tn, tc), lambda c, n: (n, c)),
        compiler_params=pltpu.CompilerParams(
            dimension_semantics=("parallel", "parallel"),
            vmem_limit_bytes=limit,
        ),
    )(x, mean, var, mu2d, sigma2d)
    return y, mean[0], var[0]


class BatchNormState:
    """Python-side mirror of the module's running-stat bookkeeping (glue only)."""

    def __init__(self, num_channels):
        self.theta_mu = jnp.zeros((num_channels,), jnp.float32)
        self.theta_sigma = jnp.ones((num_channels,), jnp.float32)
        self.running_mean = None
        self.running_var = None

    def forward_train(self, x, **kwargs):
        y, mean, var = batchnorm_forward(x, self.theta_mu, self.theta_sigma, **kwargs)
        if self.running_mean is None:
            self.running_mean = mean
            self.running_var = var
        else:
            self.running_mean = 0.9 * self.running_mean + 0.1 * mean
            self.running_var = 0.9 * self.running_var + 0.1 * var
        return y


def _reference(x, theta_sigma, theta_mu):
    mean = jnp.mean(x, axis=0)
    var = jnp.var(x, axis=0, ddof=1)  # torch.var default: unbiased
    return theta_sigma * (x - mean) / jnp.sqrt(var + EPS) + theta_mu


if __name__ == "__main__":
    key = jax.random.PRNGKey(0)

    # Case 1: lane-dense channels, forced multi-tile channel grid.
    N, C = 8, 256
    x = jax.random.normal(key, (N, C), dtype=jnp.float32) * 2.0 + 0.5
    bn = BatchNormState(C)
    y = jax.block_until_ready(bn.forward_train(x, tile_c=128))
    y_ref = _reference(x, bn.theta_sigma, bn.theta_mu)
    assert jnp.allclose(y, y_ref, atol=1e-5, rtol=1e-5), "mismatch (C=256)"
    assert jnp.allclose(bn.running_mean, jnp.mean(x, axis=0), atol=1e-5)
    assert jnp.allclose(bn.running_var, jnp.var(x, axis=0, ddof=1), atol=1e-5)

    # Case 2: ragged channel count (C=96) -> partial last lane block, no padding.
    N2, C2 = 8, 96
    x2 = jax.random.normal(jax.random.PRNGKey(1), (N2, C2), jnp.float32) - 0.3
    bn2 = BatchNormState(C2)
    y2 = jax.block_until_ready(bn2.forward_train(x2))
    y2_ref = _reference(x2, bn2.theta_sigma, bn2.theta_mu)
    assert jnp.allclose(y2, y2_ref, atol=1e-5, rtol=1e-5), "mismatch (C=96)"

    # Case 3: forced two-pass (large-N) path at a small, fast shape; ragged N
    # exercises the in-kernel row mask and multi-block accumulation.
    N3, C3 = 37, 256
    x3 = jax.random.normal(jax.random.PRNGKey(2), (N3, C3), jnp.float32) * 1.5
    bn3 = BatchNormState(C3)
    y3, m3, v3 = batchnorm_forward(x3, bn3.theta_mu, bn3.theta_sigma,
                                   two_pass=True, tile_n=16)
    y3 = jax.block_until_ready(y3)
    y3_ref = _reference(x3, bn3.theta_sigma, bn3.theta_mu)
    assert jnp.allclose(y3, y3_ref, atol=1e-4, rtol=1e-4), "mismatch (two-pass)"
    assert jnp.allclose(m3, jnp.mean(x3, axis=0), atol=1e-5)
    assert jnp.allclose(v3, jnp.var(x3, axis=0, ddof=1), atol=1e-4)

    print("KERNEL_OK")
</pallas_src>

<mosaic_0001>
module attributes {stable_mosaic.version = 11 : i64} {
  func.func @_bn_single_pass_kernel(%arg0: i32, %arg1: memref<8x128xf32, #tpu.memory_space<vmem>>, %arg2: memref<1x128xf32, #tpu.memory_space<vmem>>, %arg3: memref<1x128xf32, #tpu.memory_space<vmem>>, %arg4: memref<8x128xf32, #tpu.memory_space<vmem>>, %arg5: memref<1x128xf32, #tpu.memory_space<vmem>>, %arg6: memref<1x128xf32, #tpu.memory_space<vmem>>) attributes {dimension_semantics = [#tpu.dimension_semantics<parallel>], iteration_bounds = array<i64: 2>, scalar_prefetch = 0 : i64, scratch_operands = 0 : i64, tpu.core_type = #tpu.core_type<tc>, window_params = [{transform_indices = @transform_0, window_bounds = array<i64: 8, 128>}, {transform_indices = @transform_1, window_bounds = array<i64: 1, 128>}, {transform_indices = @transform_2, window_bounds = array<i64: 1, 128>}, {transform_indices = @transform_3, window_bounds = array<i64: 8, 128>}, {transform_indices = @transform_4, window_bounds = array<i64: 1, 128>}, {transform_indices = @transform_5, window_bounds = array<i64: 1, 128>}]} {
    %c0 = arith.constant 0 : index
    %c0_0 = arith.constant 0 : index
    %0 = vector.load %arg1[%c0, %c0_0] : memref<8x128xf32, #tpu.memory_space<vmem>>, vector<8x128xf32>
    %cst = arith.constant dense<0.000000e+00> : vector<128xf32>
    %1 = vector.multi_reduction <add>, %0, %cst [0] : vector<8x128xf32> to vector<128xf32>
    %2 = vector.shape_cast %1 : vector<128xf32> to vector<1x128xf32>
    %cst_1 = arith.constant 8.000000e+00 : f32
    %3 = vector.broadcast %cst_1 : f32 to vector<1x128xf32>
    %4 = arith.divf %2, %3 : vector<1x128xf32>
    %5 = vector.broadcast %4 : vector<1x128xf32> to vector<8x128xf32>
    %6 = arith.subf %0, %5 : vector<8x128xf32>
    %7 = arith.mulf %6, %6 : vector<8x128xf32>
    %cst_2 = arith.constant dense<0.000000e+00> : vector<128xf32>
    %8 = vector.multi_reduction <add>, %7, %cst_2 [0] : vector<8x128xf32> to vector<128xf32>
    %9 = vector.shape_cast %8 : vector<128xf32> to vector<1x128xf32>
    %cst_3 = arith.constant 0.142857149 : f32
    %10 = vector.broadcast %cst_3 : f32 to vector<1x128xf32>
    %11 = arith.mulf %9, %10 : vector<1x128xf32>
    %c0_4 = arith.constant 0 : index
    %c0_5 = arith.constant 0 : index
    %12 = vector.load %arg3[%c0_4, %c0_5] : memref<1x128xf32, #tpu.memory_space<vmem>>, vector<1x128xf32>
    %cst_6 = arith.constant 9.99999997E-7 : f32
    %13 = vector.broadcast %cst_6 : f32 to vector<1x128xf32>
    %14 = arith.addf %11, %13 : vector<1x128xf32>
    %15 = math.rsqrt %14 : vector<1x128xf32>
    %16 = arith.mulf %12, %15 : vector<1x128xf32>
    %c0_7 = arith.constant 0 : index
    %c0_8 = arith.constant 0 : index
    %17 = vector.load %arg2[%c0_7, %c0_8] : memref<1x128xf32, #tpu.memory_space<vmem>>, vector<1x128xf32>
    %18 = arith.mulf %4, %16 : vector<1x128xf32>
    %19 = arith.subf %17, %18 : vector<1x128xf32>
    %20 = vector.broadcast %16 : vector<1x128xf32> to vector<8x128xf32>
    %21 = arith.mulf %0, %20 : vector<8x128xf32>
    %22 = vector.broadcast %19 : vector<1x128xf32> to vector<8x128xf32>
    %23 = arith.addf %21, %22 : vector<8x128xf32>
    %c0_9 = arith.constant 0 : index
    %c0_10 = arith.constant 0 : index
    %24 = vector.load %arg4[%c0_9, %c0_10] : memref<8x128xf32, #tpu.memory_space<vmem>>, vector<8x128xf32>
    tpu.vector_store %arg4[%c0_9, %c0_10], %23 {strides = array<i32>} : memref<8x128xf32, #tpu.memory_space<vmem>>, vector<8x128xf32>,
    %c0_11 = arith.constant 0 : index
    %c0_12 = arith.constant 0 : index
    %25 = vector.load %arg5[%c0_11, %c0_12] : memref<1x128xf32, #tpu.memory_space<vmem>>, vector<1x128xf32>
    tpu.vector_store %arg5[%c0_11, %c0_12], %4 {strides = array<i32>} : memref<1x128xf32, #tpu.memory_space<vmem>>, vector<1x128xf32>,
    %c0_13 = arith.constant 0 : index
    %c0_14 = arith.constant 0 : index
    %26 = vector.load %arg6[%c0_13, %c0_14] : memref<1x128xf32, #tpu.memory_space<vmem>>, vector<1x128xf32>
    tpu.vector_store %arg6[%c0_13, %c0_14], %11 {strides = array<i32>} : memref<1x128xf32, #tpu.memory_space<vmem>>, vector<1x128xf32>,
    return
  }
  func.func @transform_0(%arg0: i32) -> (i32, i32) {
    %c0_i32 = arith.constant 0 : i32
    %c0_i32_0 = arith.constant 0 : i32
    return %c0_i32, %arg0 : i32, i32
  }
  func.func @transform_1(%arg0: i32) -> (i32, i32) {
    %c0_i32 = arith.constant 0 : i32
    %c0_i32_0 = arith.constant 0 : i32
    return %c0_i32, %arg0 : i32, i32
  }
  func.func @transform_2(%arg0: i32) -> (i32, i32) {
    %c0_i32 = arith.constant 0 : i32
    %c0_i32_0 = arith.constant 0 : i32
    return %c0_i32, %arg0 : i32, i32
  }
  func.func @transform_3(%arg0: i32) -> (i32, i32) {
    %c0_i32 = arith.constant 0 : i32
    %c0_i32_0 = arith.constant 0 : i32
    return %c0_i32, %arg0 : i32, i32
  }
  func.func @transform_4(%arg0: i32) -> (i32, i32) {
    %c0_i32 = arith.constant 0 : i32
    %c0_i32_0 = arith.constant 0 : i32
    return %c0_i32, %arg0 : i32, i32
  }
  func.func @transform_5(%arg0: i32) -> (i32, i32) {
    %c0_i32 = arith.constant 0 : i32
    %c0_i32_0 = arith.constant 0 : i32
    return %c0_i32, %arg0 : i32, i32
  }
}

</mosaic_0001>

<llo_original>
// kernel: tpu_custom_call.1
$region0: #{tpu_custom_call.1}
  #allocation0 [shape = 'u32[]', space=smem, size = 0x4, offset = 0x4, fixed_abs, tag = 'smem constant byte address 0x4 - core index']
  #allocation1 [shape = 'u32[144,128]{1,0:T(1,128)}', space=vmem, size = 0x12000, scoped, tag = 'internal scratch']
  %s0 = inlined_call_operand.hbm [shape: f32[8,256], index: 0, kind: input, shape index: {}]
  %s1 = inlined_call_operand.vmem [shape: f32[1,256], index: 1, kind: input, shape index: {}]
  %s2 = inlined_call_operand.vmem [shape: f32[1,256], index: 2, kind: input, shape index: {}]
  %s3 = inlined_call_operand.hbm [shape: f32[8,256], index: 3, kind: output, shape index: {0}]
  %s4 = inlined_call_operand.hbm [shape: f32[1,256], index: 4, kind: output, shape index: {1}]
  %s5 = inlined_call_operand.hbm [shape: f32[1,256], index: 5, kind: output, shape index: {2}]
  %6 = xla_tuple %s3, %s4, %s5
  %s7 = sld [smem:[#allocation0]]
  $region65: #{tpu_custom_call.1} parent=0
    _
  %s9 = ssub.s32 1, %s7
  %s10 = scalar_select 0, %s9, %s7
  $region1: #{tpu_custom_call.1} parent=0
    #allocation2 [shape = 'u8[8192]{0}', space=vmem, size = 0x2000, scoped, tag = 'input window, operand 0']
    #allocation3 [shape = 's32[2]{0}', space=sflag, size = 0x8, scoped, tag = 'scoped memory for tpu_custom_call.1']
    #allocation4 [shape = 's32[2]{0}', space=sflag, size = 0x8, scoped, tag = 'scoped memory for tpu_custom_call.1']
    #allocation5 [shape = 'u8[8192]{0}', space=vmem, size = 0x2000, scoped, tag = 'output window, operand 0']
    #allocation6 [shape = 'u8[1024]{0}', space=vmem, size = 0x400, scoped, tag = 'output window, operand 1']
    #allocation7 [shape = 's32[2]{0}', space=sflag, size = 0x8, scoped, tag = 'scoped memory for tpu_custom_call.1']
    #allocation8 [shape = 'u8[1024]{0}', space=vmem, size = 0x400, scoped, tag = 'output window, operand 2']
    %11 = vsyncpa [#allocation3], 0
    %s12 = scalar_lea.sflag [#allocation3], 1
    %13 = vsyncpa %s12, 0
    %14 = vsyncpa [#allocation4], 0
    %s15 = scalar_lea.sflag [#allocation4], 1
    %16 = vsyncpa %s15, 0
    %17 = vsyncpa [#allocation7], 0
    %s18 = scalar_lea.sflag [#allocation7], 1
    %19 = vsyncpa %s18, 0
    loop: start=0, step=1, limit=4
    $region2: #{tpu_custom_call.1} parent=1 // loop_pre_header
      _
    $region3: #{tpu_custom_call.1} parent=1 // loop_header
      %s21 = sphi 0, %s25
      %p22 = scmp.ge.s32.totalorder %s21, 4
      %s31 = sphi 0, %s33
      %s34 = sphi 0, %s31
      %s35 = sphi 0, %s34
      %s51 = sphi 0, %s35
      %s57 = sphi 0, %s59
      %s60 = sphi 0, %s57
      %s61 = sphi 0, %s60
      %s77 = sphi 0, %s61
      %s83 = sphi 0, %s85
      %s86 = sphi 0, %s83
      %s87 = sphi 0, %s86
      %s103 = sphi 0, %s87
      %s109 = sphi 0, %s111
      %s112 = sphi 0, %s109
      %s113 = sphi 0, %s112
      %s129 = sphi 0, %s113
      %s135 = sphi 0, %s137
      %s138 = sphi 0, %s135
      %s139 = sphi 0, %s138
      %s155 = sphi 0, %s139
      %s161 = sphi 0, %s163
      %s164 = sphi 0, %s161
      %s165 = sphi 0, %s164
      %s181 = sphi 0, %s165
    $region4: #{tpu_custom_call.1} parent=1 // loop_header_branch
      %24 = sbr.rel (%p22) target = $region8
    $region5: #{tpu_custom_call.1} parent=1 // loop_body
      %s26 = ssub.s32 %s21, 1
      %s27 = ssub.s32 %s21, 2
      %s28 = sadd.s32 %s21, 1
      %s29 = ssub.s32 %s21, %s28
      %p30 = scmp.eq.s32.totalorder %s29, 0
      %s32 = sadd.s32 %s31, 1
      %s33 = scalar_select %p30, %s31, %s32
      %p36 = pneg %p30
      %p37 = scmp.eq.s32.totalorder %s21, 1
      %p38 = por %p36, %p37
      %p39 = scmp.ne.s32.totalorder %s31, %s34
      %p40 = scmp.eq.s32.totalorder %s21, 0
      %p41 = por %p39, %p40
      %p42 = scmp.ne.s32.totalorder %s31, %s34
      %p43 = scmp.eq.s32.totalorder %s26, 1
      %p44 = por %p42, %p43
      %p45 = scmp.ne.s32.totalorder %s34, %s35
      %p46 = scmp.eq.s32.totalorder %s26, 0
      %p47 = por %p45, %p46
      %p48 = scmp.ne.s32.totalorder %s34, %s35
      %p49 = scmp.eq.s32.totalorder %s27, 1
      %p50 = por %p48, %p49
      %p52 = scmp.ne.s32.totalorder %s35, %s51
      %p53 = scmp.eq.s32.totalorder %s27, 0
      %p54 = por %p52, %p53
      %s55 = ssub.s32 %s21, %s28
      %p56 = scmp.eq.s32.totalorder %s55, 0
      %s58 = sadd.s32 %s57, 1
      %s59 = scalar_select %p56, %s57, %s58
      %p62 = pneg %p56
      %p63 = scmp.eq.s32.totalorder %s21, 1
      %p64 = por %p62, %p63
      %p65 = scmp.ne.s32.totalorder %s57, %s60
      %p66 = scmp.eq.s32.totalorder %s21, 0
      %p67 = por %p65, %p66
      %p68 = scmp.ne.s32.totalorder %s57, %s60
      %p69 = scmp.eq.s32.totalorder %s26, 1
      %p70 = por %p68, %p69
      %p71 = scmp.ne.s32.totalorder %s60, %s61
      %p72 = scmp.eq.s32.totalorder %s26, 0
      %p73 = por %p71, %p72
      %p74 = scmp.ne.s32.totalorder %s60, %s61
      %p75 = scmp.eq.s32.totalorder %s27, 1
      %p76 = por %p74, %p75
      %p78 = scmp.ne.s32.totalorder %s61, %s77
      %p79 = scmp.eq.s32.totalorder %s27, 0
      %p80 = por %p78, %p79
      %s81 = ssub.s32 %s21, %s28
      %p82 = scmp.eq.s32.totalorder %s81, 0
      %s84 = sadd.s32 %s83, 1
      %s85 = scalar_select %p82, %s83, %s84
      %p88 = pneg %p82
      %p89 = scmp.eq.s32.totalorder %s21, 1
      %p90 = por %p88, %p89
      %p91 = scmp.ne.s32.totalorder %s83, %s86
      %p92 = scmp.eq.s32.totalorder %s21, 0
      %p93 = por %p91, %p92
      %p94 = scmp.ne.s32.totalorder %s83, %s86
      %p95 = scmp.eq.s32.totalorder %s26, 1
      %p96 = por %p94, %p95
      %p97 = scmp.ne.s32.totalorder %s86, %s87
      %p98 = scmp.eq.s32.totalorder %s26, 0
      %p99 = por %p97, %p98
      %p100 = scmp.ne.s32.totalorder %s86, %s87
      %p101 = scmp.eq.s32.totalorder %s27, 1
      %p102 = por %p100, %p101
      %p104 = scmp.ne.s32.totalorder %s87, %s103
      %p105 = scmp.eq.s32.totalorder %s27, 0
      %p106 = por %p104, %p105
      %s107 = ssub.s32 %s21, %s28
      %p108 = scmp.eq.s32.totalorder %s107, 0
      %s110 = sadd.s32 %s109, 1
      %s111 = scalar_select %p108, %s109, %s110
      %p114 = pneg %p108
      %p115 = scmp.eq.s32.totalorder %s21, 1
      %p116 = por %p114, %p115
      %p117 = scmp.ne.s32.totalorder %s109, %s112
      %p118 = scmp.eq.s32.totalorder %s21, 0
      %p119 = por %p117, %p118
      %p120 = scmp.ne.s32.totalorder %s109, %s112
      %p121 = scmp.eq.s32.totalorder %s26, 1
      %p122 = por %p120, %p121
      %p123 = scmp.ne.s32.totalorder %s112, %s113
      %p124 = scmp.eq.s32.totalorder %s26, 0
      %p125 = por %p123, %p124
      %p126 = scmp.ne.s32.totalorder %s112, %s113
      %p127 = scmp.eq.s32.totalorder %s27, 1
      %p128 = por %p126, %p127
      %p130 = scmp.ne.s32.totalorder %s113, %s129
      %p131 = scmp.eq.s32.totalorder %s27, 0
      %p132 = por %p130, %p131
      %s133 = ssub.s32 %s21, %s28
      %p134 = scmp.eq.s32.totalorder %s133, 0
      %s136 = sadd.s32 %s135, 1
      %s137 = scalar_select %p134, %s135, %s136
      %p140 = pneg %p134
      %p141 = scmp.eq.s32.totalorder %s21, 1
      %p142 = por %p140, %p141
      %p143 = scmp.ne.s32.totalorder %s135, %s138
      %p144 = scmp.eq.s32.totalorder %s21, 0
      %p145 = por %p143, %p144
      %p146 = scmp.ne.s32.totalorder %s135, %s138
      %p147 = scmp.eq.s32.totalorder %s26, 1
      %p148 = por %p146, %p147
      %p149 = scmp.ne.s32.totalorder %s138, %s139
      %p150 = scmp.eq.s32.totalorder %s26, 0
      %p151 = por %p149, %p150
      %p152 = scmp.ne.s32.totalorder %s138, %s139
      %p153 = scmp.eq.s32.totalorder %s27, 1
      %p154 = por %p152, %p153
      %p156 = scmp.ne.s32.totalorder %s139, %s155
      %p157 = scmp.eq.s32.totalorder %s27, 0
      %p158 = por %p156, %p157
      %s159 = ssub.s32 %s21, %s28
      %p160 = scmp.eq.s32.totalorder %s159, 0
      %s162 = sadd.s32 %s161, 1
      %s163 = scalar_select %p160, %s161, %s162
      %p166 = pneg %p160
      %p167 = scmp.eq.s32.totalorder %s21, 1
      %p168 = por %p166, %p167
      %p169 = scmp.ne.s32.totalorder %s161, %s164
      %p170 = scmp.eq.s32.totalorder %s21, 0
      %p171 = por %p169, %p170
      %p172 = scmp.ne.s32.totalorder %s161, %s164
      %p173 = scmp.eq.s32.totalorder %s26, 1
      %p174 = por %p172, %p173
      %p175 = scmp.ne.s32.totalorder %s164, %s165
      %p176 = scmp.eq.s32.totalorder %s26, 0
      %p177 = por %p175, %p176
      %p178 = scmp.ne.s32.totalorder %s164, %s165
      %p179 = scmp.eq.s32.totalorder %s27, 1
      %p180 = por %p178, %p179
      %p182 = scmp.ne.s32.totalorder %s165, %s181
      %p183 = scmp.eq.s32.totalorder %s27, 0
      %p184 = por %p182, %p183
      %p185 = scmp.le.s32.totalorder 1, %s21
      %p186 = scmp.lt.s32.totalorder %s21, 3
      %p187 = pnand %p185, %p186
      %p188 = pneg %p187
      // Predicated region
      $region9: #{tpu_custom_call.1} parent=5 // pred_check
        _
      $region10: #{tpu_custom_call.1} parent=5 // pred_check_branch
        %190 = sbr.rel (%p187) target = $region12
      $region11: #{tpu_custom_call.1} parent=5 // pred_region
        %s191 = ssub.s32 %s21, 1
      $region12: #{tpu_custom_call.1} parent=5 // pred_fallthru
        _
      %p192 = scmp.lt.s32.totalorder %s21, 2
      // Predicated region
      $region13: #{tpu_custom_call.1} parent=5 // pred_check
        %p193 = pneg %p192
      $region14: #{tpu_custom_call.1} parent=5 // pred_check_branch
        %195 = sbr.rel (%p193) target = $region16
      $region15: #{tpu_custom_call.1} parent=5 // pred_region
        // Predicated region
        $region17: #{tpu_custom_call.1} parent=15 // pred_check
          %p196 = pneg %p41
        $region18: #{tpu_custom_call.1} parent=15 // pred_check_branch
          %198 = sbr.rel (%p196) target = $region20
        $region19: #{tpu_custom_call.1} parent=15 // pred_region
          %s199 = sand.u32 %s31, 1
          %s200 = scalar_lea.sflag [#allocation3], %s199
          %s201 = sand.u32 %s31, 1
          %s202 = smul.addr %s201, 8
          %s203 = scalar_lea.vmem [#allocation2], %s202
          %s205 = ssub.s32 128, 128
          %206 = vsyncadd %s200, %s205
          %s207 = smul.addr %s21, 128
          %s208 = scalar_lea.hbm %s0, %s207
          %s210 = sshll.u32 %s203, 4
          %s211 = int_to_ptr.vmem [resolvable:$true] %s210
          %213 = dma.hbm_to_vmem [thread:$0]  %s208, 128, %s211, %s200
        $region20: #{tpu_custom_call.1} parent=15 // pred_fallthru
          _
        // Predicated region
        $region21: #{tpu_custom_call.1} parent=15 // pred_check
          %p214 = pneg %p67
        $region22: #{tpu_custom_call.1} parent=15 // pred_check_branch
          %216 = sbr.rel (%p214) target = $region24
        $region23: #{tpu_custom_call.1} parent=15 // pred_region
          %p217 = scmp.lt.s32.totalorder %s21, 1
          %s218 = scalar_select %p217, %s21, 1
          %s219 = scalar_lea.vmem %s1, %s218
        $region24: #{tpu_custom_call.1} parent=15 // pred_fallthru
          _
        // Predicated region
        $region25: #{tpu_custom_call.1} parent=15 // pred_check
          %p220 = pneg %p93
        $region26: #{tpu_custom_call.1} parent=15 // pred_check_branch
          %222 = sbr.rel (%p220) target = $region28
        $region27: #{tpu_custom_call.1} parent=15 // pred_region
          %p223 = scmp.lt.s32.totalorder %s21, 1
          %s224 = scalar_select %p223, %s21, 1
          %s225 = scalar_lea.vmem %s2, %s224
        $region28: #{tpu_custom_call.1} parent=15 // pred_fallthru
          _
      $region16: #{tpu_custom_call.1} parent=5 // pred_fallthru
        _
      %p226 = scmp.le.s32.totalorder 1, %s21
      %p227 = scmp.lt.s32.totalorder %s21, 3
      %p228 = pnand %p226, %p227
      %p229 = pneg %p228
      // Predicated region
      $region29: #{tpu_custom_call.1} parent=5 // pred_check
        _
      $region30: #{tpu_custom_call.1} parent=5 // pred_check_branch
        %231 = sbr.rel (%p228) target = $region32
      $region31: #{tpu_custom_call.1} parent=5 // pred_region
        %s232 = ssub.s32 %s21, 1
        %s233 = sand.u32 %s34, 1
        %s234 = scalar_lea.sflag [#allocation3], %s233
        %s235 = sand.u32 %s34, 1
        %s236 = smul.addr %s235, 8
        %s237 = scalar_lea.vmem [#allocation2], %s236
        // Predicated region
        $region33: #{tpu_custom_call.1} parent=31 // pred_check
          %p238 = pneg %p47
        $region34: #{tpu_custom_call.1} parent=31 // pred_check_branch
          %240 = sbr.rel (%p238) target = $region36
        $region35: #{tpu_custom_call.1} parent=31 // pred_region
          %241 = dma.done %s234, 128
        $region36: #{tpu_custom_call.1} parent=31 // pred_fallthru
          _
        %s242 = sand.u32 %s34, 1
        %s243 = scalar_lea.sflag [#allocation3], %s242
        %s244 = sand.u32 %s34, 1
        %s245 = smul.addr %s244, 8
        %s246 = scalar_lea.vmem [#allocation2], %s245
        %p247 = pneg %p47
        %p248 = pneg %p44
        %p249 = scmp.lt.s32.totalorder %s26, 1
        %s250 = scalar_select %p249, %s26, 1
        %s251 = scalar_lea.vmem %s1, %s250
        %p252 = pneg %p73
        %p253 = pneg %p70
        %p254 = scmp.lt.s32.totalorder %s26, 1
        %s255 = scalar_select %p254, %s26, 1
        %s256 = scalar_lea.vmem %s2, %s255
        %p257 = pneg %p99
        %p258 = pneg %p96
        %p259 = pneg %p125
        %p260 = pneg %p122
        %s261 = sand.u32 %s112, 1
        %s262 = scalar_lea.sflag [#allocation4], %s261
        %s263 = sand.u32 %s112, 1
        %s264 = smul.addr %s263, 8
        %s265 = scalar_lea.vmem [#allocation5], %s264
        %p266 = pneg %p151
        %p267 = pneg %p148
        %s268 = sand.u32 %s26, 1
        %s269 = scalar_lea.sflag [#allocation7], %s268
        %s270 = sand.u32 %s138, 1
        %s271 = scalar_lea.vmem [#allocation6], %s270
        %p272 = pneg %p177
        %p273 = pneg %p174
        %s274 = sand.u32 %s26, 1
        %s275 = scalar_lea.sflag [#allocation7], %s274
        %s276 = sand.u32 %s164, 1
        %s277 = scalar_lea.vmem [#allocation8], %s276
        %p278 = scmp.lt.s32.totalorder %s26, 1
        %s279 = scalar_select %p278, %s26, 1
        %s280 = scalar_lea.vmem %s1, %s279
        %p281 = scmp.lt.s32.totalorder %s26, 1
        %s282 = scalar_select %p281, %s26, 1
        %s283 = scalar_lea.vmem %s2, %s282
        %v284 = vld [vmem:[%s237] sm:$0xff]
        %v285 = vrot.slane %v284, 4
        %v286 = vadd.f32 %v284, %v285
        %v287 = vrot.slane %v286, 2
        %v288 = vadd.f32 %v286, %v287
        %v289 = vrot.slane %v288, 1
        %v290 = vadd.f32 %v288, %v289
        %v291 = vrcp.pop 8.0
        %v292 = vmul.f32 %v290, %v291
        %v293 = vsub.f32 %v284, %v292
        %v294 = vmul.f32 %v293, %v293
        %v295 = vrot.slane %v294, 4
        %v296 = vadd.f32 %v294, %v295
        %v297 = vrot.slane %v296, 2
        %v298 = vadd.f32 %v296, %v297
        %v299 = vrot.slane %v298, 1
        %v300 = vadd.f32 %v298, %v299
        %v301 = vmul.f32 %v300, 0.14285715
        %v302 = vld [vmem:[%s283] sm:$0x1]
        %v303 = vadd.f32 %v301, 1e-06
        %v304 = vrsqrt.pop %v303
        %v305 = vmul.f32 %v302, %v304
        %v306 = vld [vmem:[%s280] sm:$0x1]
        %v307 = vmul.f32 %v292, %v305
        %v308 = vsub.f32 %v306, %v307
        %v310 = vlaneseq
        %v311 = vshrl.u32 %v310, 7
        %v312 = vsub.s32 0, %v311
        %v313 = vrot.slane %v305, %v312
        %v315 = vmul.f32 %v284, %v313
        %v317 = vlaneseq
        %v318 = vshrl.u32 %v317, 7
        %v319 = vsub.s32 0, %v318
        %v320 = vrot.slane %v308, %v319
        %v322 = vadd.f32 %v315, %v320
        %323 = vst [vmem:[%s265] sm:$0xff] %v322
        %324 = vst [vmem:[%s271] sm:$0x1] %v292
        %325 = vst [vmem:[%s277] sm:$0x1] %v301
        %s326 = sand.u32 %s112, 1
        %s327 = scalar_lea.sflag [#allocation4], %s326
        %s328 = sand.u32 %s112, 1
        %s329 = smul.addr %s328, 8
        %s330 = scalar_lea.vmem [#allocation5], %s329
        %s331 = sand.u32 %s26, 1
        %s332 = scalar_lea.sflag [#allocation7], %s331
        %s333 = sand.u32 %s138, 1
        %s334 = scalar_lea.vmem [#allocation6], %s333
        %s335 = sand.u32 %s26, 1
        %s336 = scalar_lea.sflag [#allocation7], %s335
        %s337 = sand.u32 %s164, 1
        %s338 = scalar_lea.vmem [#allocation8], %s337
        // Predicated region
        $region37: #{tpu_custom_call.1} parent=31 // pred_check
          %p339 = pneg %p122
        $region38: #{tpu_custom_call.1} parent=31 // pred_check_branch
          %341 = sbr.rel (%p339) target = $region40
        $region39: #{tpu_custom_call.1} parent=31 // pred_region
          %s343 = ssub.s32 128, 128
          %344 = vsyncadd %s327, %s343
          %s345 = smul.addr %s26, 128
          %s346 = scalar_lea.hbm %s3, %s345
          %s348 = sshll.u32 %s330, 4
          %s349 = int_to_ptr.vmem [resolvable:$true] %s348
          %351 = dma.vmem_to_hbm [thread:$0]  %s349, 128, %s346, %s327
        $region40: #{tpu_custom_call.1} parent=31 // pred_fallthru
          _
        // Predicated region
        $region41: #{tpu_custom_call.1} parent=31 // pred_check
          %p352 = pneg %p148
        $region42: #{tpu_custom_call.1} parent=31 // pred_check_branch
          %354 = sbr.rel (%p352) target = $region44
        $region43: #{tpu_custom_call.1} parent=31 // pred_region
          %s356 = ssub.s32 16, 16
          %357 = vsyncadd %s332, %s356
          %s358 = smul.addr %s26, 16
          %s359 = scalar_lea.hbm %s4, %s358
          %s361 = sshll.u32 %s334, 4
          %s362 = int_to_ptr.vmem [resolvable:$true] %s361
          %364 = dma.vmem_to_hbm [thread:$0]  %s362, 16, %s359, %s332
        $region44: #{tpu_custom_call.1} parent=31 // pred_fallthru
          _
        // Predicated region
        $region45: #{tpu_custom_call.1} parent=31 // pred_check
          %p365 = pneg %p174
        $region46: #{tpu_custom_call.1} parent=31 // pred_check_branch
          %367 = sbr.rel (%p365) target = $region48
        $region47: #{tpu_custom_call.1} parent=31 // pred_region
          %s369 = ssub.s32 16, 16
          %370 = vsyncadd %s336, %s369
          %s371 = smul.addr %s26, 16
          %s372 = scalar_lea.hbm %s5, %s371
          %s374 = sshll.u32 %s338, 4
          %s375 = int_to_ptr.vmem [resolvable:$true] %s374
          %377 = dma.vmem_to_hbm [thread:$0]  %s375, 16, %s372, %s336
        $region48: #{tpu_custom_call.1} parent=31 // pred_fallthru
          _
      $region32: #{tpu_custom_call.1} parent=5 // pred_fallthru
        _
      %p378 = scmp.le.s32.totalorder 2, %s21
      // Predicated region
      $region49: #{tpu_custom_call.1} parent=5 // pred_check
        %p379 = pneg %p378
      $region50: #{tpu_custom_call.1} parent=5 // pred_check_branch
        %381 = sbr.rel (%p379) target = $region52
      $region51: #{tpu_custom_call.1} parent=5 // pred_region
        %s382 = ssub.s32 %s21, 2
        // Predicated region
        $region53: #{tpu_custom_call.1} parent=51 // pred_check
          %p383 = pneg %p128
        $region54: #{tpu_custom_call.1} parent=51 // pred_check_branch
          %385 = sbr.rel (%p383) target = $region56
        $region55: #{tpu_custom_call.1} parent=51 // pred_region
          %s386 = sand.u32 %s113, 1
          %s387 = scalar_lea.sflag [#allocation4], %s386
          %s388 = sand.u32 %s113, 1
          %s389 = smul.addr %s388, 8
          %s390 = scalar_lea.vmem [#allocation5], %s389
          %391 = dma.done %s387, 128
        $region56: #{tpu_custom_call.1} parent=51 // pred_fallthru
          _
        // Predicated region
        $region57: #{tpu_custom_call.1} parent=51 // pred_check
          %p392 = pneg %p154
        $region58: #{tpu_custom_call.1} parent=51 // pred_check_branch
          %394 = sbr.rel (%p392) target = $region60
        $region59: #{tpu_custom_call.1} parent=51 // pred_region
          %s395 = sand.u32 %s27, 1
          %s396 = scalar_lea.sflag [#allocation7], %s395
          %s397 = sand.u32 %s139, 1
          %s398 = scalar_lea.vmem [#allocation6], %s397
          %399 = dma.done %s396, 16
        $region60: #{tpu_custom_call.1} parent=51 // pred_fallthru
          _
        // Predicated region
        $region61: #{tpu_custom_call.1} parent=51 // pred_check
          %p400 = pneg %p180
        $region62: #{tpu_custom_call.1} parent=51 // pred_check_branch
          %402 = sbr.rel (%p400) target = $region64
        $region63: #{tpu_custom_call.1} parent=51 // pred_region
          %s403 = sand.u32 %s27, 1
          %s404 = scalar_lea.sflag [#allocation7], %s403
          %s405 = sand.u32 %s165, 1
          %s406 = scalar_lea.vmem [#allocation8], %s405
          %407 = dma.done %s404, 16
        $region64: #{tpu_custom_call.1} parent=51 // pred_fallthru
          _
      $region52: #{tpu_custom_call.1} parent=5 // pred_fallthru
        _
    $region6: #{tpu_custom_call.1} parent=1 // loop_footer
      %s25 = sadd.s32 1, %s21
    $region7: #{tpu_custom_call.1} parent=1 // loop_footer_branch
      %20 = sbr.rel target = $region3
    $region8: #{tpu_custom_call.1} parent=1 // loop_exit
      _
    %408 = vsyncpa [#allocation3], 1
    %s409 = scalar_lea.sflag [#allocation3], 1
    %410 = vsyncpa %s409, 1
    %411 = vsyncpa [#allocation4], 1
    %s412 = scalar_lea.sflag [#allocation4], 1
    %413 = vsyncpa %s412, 1
    %414 = vsyncpa [#allocation7], 1
    %s415 = scalar_lea.sflag [#allocation7], 1
    %416 = vsyncpa %s415, 1

</llo_original>
